<compile_context>
chip_gen: v7x
topology: tpu7x:2x2x1
jax: 0.10.0
libtpu: 0.0.40
codegen_flags: <defaults>
</compile_context>

<pallas_src>
import functools

import jax
import jax.numpy as jnp
import numpy as np
from jax.experimental import pallas as pl
from jax.experimental.pallas import tpu as pltpu

_LANE = 128
_ZERO_TILE_BYTES = 4 * 1024 * 1024  # single (un-pipelined) zero tile in VMEM


def _make_stochdepth_kernel(chunks, full_rows):
    """Build the kernel. `chunks` is a static tuple of (row_offset, rows)."""

    def kernel(mask_ref, x_hbm, o_hbm, zeros_ref, sems):
        # x_hbm is intentionally unused: the output buffer is aliased to it, so
        # kept samples already hold the right data and cost zero HBM traffic.
        del x_hbm
        b = pl.program_id(0)

        # One-time init of the zero tile (grid is sequential: "arbitrary").
        @pl.when(b == 0)
        def _init():
            zeros_ref[...] = jnp.zeros_like(zeros_ref)

        # Dropped sample -> overwrite its whole feature row with zeros.
        # Start every chunk DMA before waiting so the HBM writes overlap.
        @pl.when(mask_ref[b] == 0)
        def _drop():
            copies = []
            for i, (off, rows) in enumerate(chunks):
                src = zeros_ref if rows == full_rows else zeros_ref.at[pl.ds(0, rows), :]
                cp = pltpu.make_async_copy(
                    src,
                    o_hbm.at[b, pl.ds(off, rows), :],
                    sems.at[i],
                )
                cp.start()
                copies.append(cp)
            for cp in copies:
                cp.wait()

    return kernel


def stoch_depth(x, *, drop_rate: float, seed: int, training: bool = True):
    """Pallas StochDepth forward for any (B, ...) input (e.g. NCHW).

    Training: out[b] = x[b] * floor(U[0,1) + (1 - drop_rate)).  Eval: identity.
    Callers should jit this (per-sample work is tiny) and vary `seed` per
    step/layer so drop masks are not reused across calls.
    """
    if not training or drop_rate <= 0.0:
        return x

    B = x.shape[0]
    F = int(np.prod(x.shape[1:]))
    keep_prob = 1.0 - float(drop_rate)

    # Per-sample keep/drop mask (1 = keep), computed once in the wrapper;
    # matches torch.floor(rand(B,1,1,1) + keep_prob).
    rand = jax.random.uniform(jax.random.PRNGKey(seed), (B,), dtype=jnp.float32)
    mask = jnp.floor(rand + jnp.float32(keep_prob)).astype(jnp.int32)

    # Flatten features and view as (B, S, 128).  Manual DMA has no (8,128)
    # BlockSpec constraint, so pad only to a multiple of 128 lanes, only when
    # needed (pad + final slice each cost one extra HBM pass).
    S = -(-F // _LANE)
    F_pad = S * _LANE
    xf = x.reshape(B, F)
    if F_pad != F:
        # TODO(synk): a masked partial-lane DMA on the tail chunk would avoid
        # this pad/slice copy for lane-unaligned feature sizes.
        xf = jnp.pad(xf, ((0, 0), (0, F_pad - F)))
    x3 = xf.reshape(B, S, _LANE)

    # Zero-tile sizing: <=4 MiB, dtype-aware sublane rounding.
    itemsize = x.dtype.itemsize
    sublane = max(8, 32 // itemsize)          # 8 f32 / 16 bf16 / 32 int8
    max_rows = max(sublane, _ZERO_TILE_BYTES // (_LANE * itemsize))
    max_rows -= max_rows % sublane
    ts = min(S, max_rows)

    chunks = []
    off = 0
    while off < S:
        rows = min(ts, S - off)
        chunks.append((off, rows))
        off += rows
    chunks = tuple(chunks)

    kernel = _make_stochdepth_kernel(chunks, ts)

    out = pl.pallas_call(
        kernel,
        out_shape=jax.ShapeDtypeStruct((B, S, _LANE), x.dtype),
        grid_spec=pltpu.PrefetchScalarGridSpec(
            num_scalar_prefetch=1,                        # (B,) keep-mask -> SMEM
            grid=(B,),                                    # one step per sample
            in_specs=[pl.BlockSpec(memory_space=pl.ANY)],  # x stays in HBM
            out_specs=pl.BlockSpec(memory_space=pl.ANY),   # out stays in HBM
            scratch_shapes=[
                pltpu.VMEM((ts, _LANE), x.dtype),          # zero tile
                pltpu.SemaphoreType.DMA((len(chunks),)),   # one sem per chunk
            ],
        ),
        # Output aliases x3 (operand index 1, counting the prefetched mask):
        # kept samples are never touched; dropped samples are zeroed in place.
        input_output_aliases={1: 0},
        compiler_params=pltpu.CompilerParams(
            dimension_semantics=("arbitrary",),  # sequential: zero-tile init at b==0
            has_side_effects=True,               # manual DMAs into the aliased output
        ),
    )(mask, x3)

    if F_pad != F:
        out = out.reshape(B, F_pad)[:, :F]
    return out.reshape(x.shape)


if __name__ == "__main__":
    def ref_fwd(xn, drop_rate, seed):
        # Independent numpy reference of the same contract (f32 throughout).
        rand = np.asarray(
            jax.random.uniform(jax.random.PRNGKey(seed), (xn.shape[0],),
                               dtype=jnp.float32)).astype(np.float32)
        m = np.floor(rand + np.float32(1.0 - drop_rate))
        return xn * m.reshape((-1,) + (1,) * (xn.ndim - 1)), m

    # Case 1: lane-aligned features (C*H*W % 128 == 0), moderate drop rate.
    x = jax.random.normal(jax.random.PRNGKey(0), (2, 4, 16, 16), dtype=jnp.float32)
    fwd = jax.jit(functools.partial(stoch_depth, drop_rate=0.2, seed=1234,
                                    training=True))
    y = np.asarray(jax.block_until_ready(fwd(x)))
    xn = np.asarray(x)
    ref, _ = ref_fwd(xn, 0.2, 1234)
    assert np.allclose(y, ref), "case1: kernel output mismatch vs reference"
    for b in range(xn.shape[0]):
        assert np.allclose(y[b], 0.0) or np.allclose(y[b], xn[b]), "case1: bad mask"

    # Case 2: high drop rate so the zero-DMA (drop) path is exercised.
    x2 = jax.random.normal(jax.random.PRNGKey(1), (8, 4, 16, 16), dtype=jnp.float32)
    fwd2 = jax.jit(functools.partial(stoch_depth, drop_rate=0.9, seed=7,
                                     training=True))
    y2 = np.asarray(jax.block_until_ready(fwd2(x2)))
    ref2, _ = ref_fwd(np.asarray(x2), 0.9, 7)
    assert np.allclose(y2, ref2), "case2: kernel output mismatch vs reference"

    # Case 3: feature size not a multiple of 128 (pad/slice fallback path).
    x3 = jax.random.normal(jax.random.PRNGKey(2), (3, 3, 5, 7), dtype=jnp.float32)
    fwd3 = jax.jit(functools.partial(stoch_depth, drop_rate=0.5, seed=3,
                                     training=True))
    y3 = np.asarray(jax.block_until_ready(fwd3(x3)))
    ref3, _ = ref_fwd(np.asarray(x3), 0.5, 3)
    assert np.allclose(y3, ref3), "case3: kernel output mismatch vs reference"

    # Eval mode is identity.
    y_eval = stoch_depth(x, drop_rate=0.2, seed=1234, training=False)
    assert np.allclose(np.asarray(jax.block_until_ready(y_eval)), xn)

    print("KERNEL_OK")
</pallas_src>

<mosaic_0001>
module attributes {stable_mosaic.version = 11 : i64} {
  func.func @kernel(%arg0: i32, %arg1: memref<2xi32, #tpu.memory_space<smem>>, %arg2: memref<2x8x128xf32, #tpu.memory_space<any>>, %arg3: memref<2x8x128xf32, #tpu.memory_space<any>>, %arg4: memref<8x128xf32, #tpu.memory_space<vmem>>, %arg5: memref<1x!tpu.dma_semaphore, #tpu.memory_space<semaphore_mem>>) attributes {dimension_semantics = [#tpu.dimension_semantics<arbitrary>], iteration_bounds = array<i64: 2>, scalar_prefetch = 1 : i64, scratch_operands = 2 : i64, tpu.core_type = #tpu.core_type<tc>, window_params = [{}, {}]} {
    %c0_i32 = arith.constant 0 : i32
    %0 = arith.cmpi eq, %arg0, %c0_i32 : i32
    %1 = arith.extui %0 : i1 to i32
    %c0_i32_0 = arith.constant 0 : i32
    %2 = arith.cmpi ne, %1, %c0_i32_0 : i32
    scf.if %2 {
      %cst = arith.constant 0.000000e+00 : f32
      %8 = vector.broadcast %cst : f32 to vector<8x128xf32>
      %c0 = arith.constant 0 : index
      %c0_3 = arith.constant 0 : index
      %9 = vector.load %arg4[%c0, %c0_3] : memref<8x128xf32, #tpu.memory_space<vmem>>, vector<8x128xf32>
      tpu.vector_store %arg4[%c0, %c0_3], %8 {strides = array<i32>} : memref<8x128xf32, #tpu.memory_space<vmem>>, vector<8x128xf32>,
    } else {
    }
    %3 = arith.index_cast %arg0 : i32 to index
    %4 = memref.load %arg1[%3] : memref<2xi32, #tpu.memory_space<smem>>
    %c0_i32_1 = arith.constant 0 : i32
    %5 = arith.cmpi eq, %4, %c0_i32_1 : i32
    %6 = arith.extui %5 : i1 to i32
    %c0_i32_2 = arith.constant 0 : i32
    %7 = arith.cmpi ne, %6, %c0_i32_2 : i32
    scf.if %7 {
      %c0_i32_3 = arith.constant 0 : i32
      %c0_i32_4 = arith.constant 0 : i32
      %c0_i32_5 = arith.constant 0 : i32
      %8 = tpu.memref_slice %arg3[%arg0, %c0_i32_4, %c0_i32_5] : memref<2x8x128xf32, #tpu.memory_space<any>> -> memref<1x8x128xf32, #tpu.memory_space<any>>
      %9 = tpu.memref_squeeze %8 : memref<1x8x128xf32, #tpu.memory_space<any>> -> memref<8x128xf32, #tpu.memory_space<any>>
      %10 = tpu.memref_slice %arg5[%c0_i32_3] : memref<1x!tpu.dma_semaphore, #tpu.memory_space<semaphore_mem>> -> memref<1x!tpu.dma_semaphore, #tpu.memory_space<semaphore_mem>>
      %11 = tpu.memref_squeeze %10 : memref<1x!tpu.dma_semaphore, #tpu.memory_space<semaphore_mem>> -> memref<!tpu.dma_semaphore, #tpu.memory_space<semaphore_mem>>
      tpu.enqueue_dma source(%arg4 : memref<8x128xf32, #tpu.memory_space<vmem>>) target(%9 : memref<8x128xf32, #tpu.memory_space<any>>) target_semaphore(%11 : memref<!tpu.dma_semaphore, #tpu.memory_space<semaphore_mem>>)
      %c0_i32_6 = arith.constant 0 : i32
      %c0_i32_7 = arith.constant 0 : i32
      %c0_i32_8 = arith.constant 0 : i32
      %12 = tpu.memref_slice %arg3[%arg0, %c0_i32_7, %c0_i32_8] : memref<2x8x128xf32, #tpu.memory_space<any>> -> memref<1x8x128xf32, #tpu.memory_space<any>>
      %13 = tpu.memref_squeeze %12 : memref<1x8x128xf32, #tpu.memory_space<any>> -> memref<8x128xf32, #tpu.memory_space<any>>
      %14 = tpu.memref_slice %arg5[%c0_i32_6] : memref<1x!tpu.dma_semaphore, #tpu.memory_space<semaphore_mem>> -> memref<1x!tpu.dma_semaphore, #tpu.memory_space<semaphore_mem>>
      %15 = tpu.memref_squeeze %14 : memref<1x!tpu.dma_semaphore, #tpu.memory_space<semaphore_mem>> -> memref<!tpu.dma_semaphore, #tpu.memory_space<semaphore_mem>>
      tpu.wait_dma2 semaphore(%15 : memref<!tpu.dma_semaphore, #tpu.memory_space<semaphore_mem>>) src(%arg4 : memref<8x128xf32, #tpu.memory_space<vmem>>) dst(%13 : memref<8x128xf32, #tpu.memory_space<any>>)
    } else {
    }
    return
  }
}

</mosaic_0001>

<llo_original>
// kernel: stoch_depth.1
$region0: #{stoch_depth.1}
  #allocation0 [shape = 'u32[]', space=smem, size = 0x4, offset = 0x4, fixed_abs, tag = 'smem constant byte address 0x4 - core index']
  #allocation1 [shape = 'u32[144,128]{1,0:T(1,128)}', space=vmem, size = 0x12000, scoped, tag = 'internal scratch']
  #allocation2 [shape = 'f32[8,128]{1,0:T(8,128)}', space=vmem, size = 0x1000, scoped, tag = 'scratch operand']
  #allocation3 [shape = 's32[1]{0}', space=sflag, size = 0x4, scoped, tag = 'scratch operand']
  #allocation4 [shape = 's32[1]{0}', space=sflag, size = 0x4, scoped, tag = 'scoped memory for stoch_depth.1']
  #allocation5 [shape = 'u8[512]{0}', space=smem, size = 0x200, scoped, tag = 'prefetched SMEM operand 0']
  #allocation6 [shape = 's32[]', space=sflag, size = 0x4, offset = 0, fixed_abs, tag = 'sflag constant byte address 0x0 - dummy sync flag']
  %s0 = inlined_call_operand.vmem [shape: s32[2], index: 0, kind: input, shape index: {}]
  %s1 = inlined_call_operand.vmem [shape: f32[2,8,128], index: 1, kind: input, shape index: {}, may-alias: {1,2}]
  %s2 = inlined_call_operand.vmem [shape: f32[2,8,128], index: 2, kind: output, shape index: {}, may-alias: {1,2}]
  %s3 = sld [smem:[#allocation0]]
  $region51: #{stoch_depth.1} parent=0
    _
  %s5 = ssub.s32 1, %s3
  %s6 = scalar_select 0, %s5, %s3
  %s7 = sshll.u32 %s0, 4
  %s8 = int_to_ptr.vmem [resolvable:$true] %s7
  %10 = dma.vmem_to_smem %s8, 16, [#allocation5], [#allocation4]
  %11 = dma.done [#allocation4], 16
  %12 = sfence
  loop: start=0, step=1, limit=2
  $region2: #{stoch_depth.1} parent=0 // loop_pre_header
    _
  $region3: #{stoch_depth.1} parent=0 // loop_header
    %s14 = sphi 0, %s18
    %p15 = scmp.ge.s32.totalorder %s14, 2
  $region4: #{stoch_depth.1} parent=0 // loop_header_branch
    %17 = sbr.rel (%p15) target = $region8
  $region5: #{stoch_depth.1} parent=0 // loop_body
    %s19 = sadd.s32 %s14, 1
    %p20 = scmp.eq.s32.totalorder %s14, 0
    // Predicated region
    $region9: #{stoch_depth.1} parent=5 // pred_check
      %p21 = pneg %p20
    $region10: #{stoch_depth.1} parent=5 // pred_check_branch
      %23 = sbr.rel (%p21) target = $region12
    $region11: #{stoch_depth.1} parent=5 // pred_region
      %24 = vst [vmem:[#allocation2] sm:$0xff] 0.0
    $region12: #{stoch_depth.1} parent=5 // pred_fallthru
      _
    %s25 = sld [smem:[#allocation5 + %s14]]
    %p26 = scmp.eq.s32.totalorder %s25, 0
    // Predicated region
    $region13: #{stoch_depth.1} parent=5 // pred_check
      %p27 = pneg %p26
    $region14: #{stoch_depth.1} parent=5 // pred_check_branch
      %29 = sbr.rel (%p27) target = $region16
    $region15: #{stoch_depth.1} parent=5 // pred_region
      %s30 = smul.u32 %s14, 8
      %s31 = scalar_lea.vmem %s2, %s30
      %p33 = scmp.lt.u32.totalorder 8, 8
      %p34 = pneg %p33
      // Predicated region
      $region17: #{stoch_depth.1} parent=15 // pred_check
        _
      $region18: #{stoch_depth.1} parent=15 // pred_check_branch
        %36 = sbr.rel (%p33) target = $region20
      $region19: #{stoch_depth.1} parent=15 // pred_region
        %s51 = sand.u32 8, 7
        %p52 = scmp.eq.s32.totalorder %s51, 0
        // Predicated region
        $region32: #{stoch_depth.1} parent=19 // pred_check
          %p53 = pneg %p52
        $region33: #{stoch_depth.1} parent=19 // pred_check_branch
          %55 = sbr.rel (%p53) target = $region35
        $region34: #{stoch_depth.1} parent=19 // pred_region
          loop: start=0, step=1, limit=1
          $region36: #{stoch_depth.1} parent=34 // loop_pre_header
            _
          $region37: #{stoch_depth.1} parent=34 // loop_header
            %s57 = sphi 0, %s61
            %p58 = scmp.ge.s32.totalorder %s57, 1
            %s62 = sphi [#allocation2], [#allocation2]
            %s63 = sphi %s31, %s31
          $region38: #{stoch_depth.1} parent=34 // loop_header_branch
            %60 = sbr.rel (%p58) target = $region42
          $region39: #{stoch_depth.1} parent=34 // loop_body
            %v64 = vld [vmem:[%s62] sm:$0xff]
            %65 = vst [vmem:[%s63] sm:$0xff] %v64
          $region40: #{stoch_depth.1} parent=34 // loop_footer
            %s61 = sadd.s32 1, %s57
          $region41: #{stoch_depth.1} parent=34 // loop_footer_branch
            %56 = sbr.rel target = $region37
          $region42: #{stoch_depth.1} parent=34 // loop_exit
            _
        $region35: #{stoch_depth.1} parent=19 // pred_fallthru
          _
        %p66 = pneg %p52
        // Predicated region
        $region43: #{stoch_depth.1} parent=19 // pred_check
          _
        $region44: #{stoch_depth.1} parent=19 // pred_check_branch
          %68 = sbr.rel (%p52) target = $region46
        $region45: #{stoch_depth.1} parent=19 // pred_region
          %s69 = sand.u32 8, 7
        $region46: #{stoch_depth.1} parent=19 // pred_fallthru
          _
      $region20: #{stoch_depth.1} parent=15 // pred_fallthru
        _
      // Predicated region
      $region21: #{stoch_depth.1} parent=15 // pred_check
        %p37 = pneg %p33
      $region22: #{stoch_depth.1} parent=15 // pred_check_branch
        %39 = sbr.rel (%p37) target = $region24
      $region23: #{stoch_depth.1} parent=15 // pred_region
        %s40 = sshllo.u32 0, 8
        loop: start=0, step=1, limit=1
        $region25: #{stoch_depth.1} parent=23 // loop_pre_header
          _
        $region26: #{stoch_depth.1} parent=23 // loop_header
          %s42 = sphi 0, %s46
          %p43 = scmp.ge.s32.totalorder %s42, 1
          %s47 = sphi [#allocation2], [#allocation2]
          %s48 = sphi %s31, %s31
        $region27: #{stoch_depth.1} parent=23 // loop_header_branch
          %45 = sbr.rel (%p43) target = $region31
        $region28: #{stoch_depth.1} parent=23 // loop_body
          %v49 = vld [vmem:[%s47] sm:%s40]
          %50 = vst [vmem:[%s48] sm:%s40] %v49
        $region29: #{stoch_depth.1} parent=23 // loop_footer
          %s46 = sadd.s32 1, %s42
        $region30: #{stoch_depth.1} parent=23 // loop_footer_branch
          %41 = sbr.rel target = $region26
        $region31: #{stoch_depth.1} parent=23 // loop_exit
          _
      $region24: #{stoch_depth.1} parent=15 // pred_fallthru
        _
      // Predicated region
      $region47: #{stoch_depth.1} parent=15 // pred_check
        _
      $region48: #{stoch_depth.1} parent=15 // pred_check_branch
        %72 = sbr.rel (0) target = $region50
      $region49: #{stoch_depth.1} parent=15 // pred_region
        %73 = vsyncadd [#allocation3], 128
      $region50: #{stoch_depth.1} parent=15 // pred_fallthru
        _
      %s74 = smul.u32 8, 1
      %s75 = sshll.u32 %s74, 4
      %76 = dma.done [#allocation3], %s75
    $region16: #{stoch_depth.1} parent=5 // pred_fallthru
      _
  $region6: #{stoch_depth.1} parent=0 // loop_footer
    %s18 = sadd.s32 1, %s14
  $region7: #{stoch_depth.1} parent=0 // loop_footer_branch
    %13 = sbr.rel target = $region3
  $region8: #{stoch_depth.1} parent=0 // loop_exit
    _
  %77 = vsyncmov [#allocation3]
  %s78 = vpop.sfrf %77
  %p79 = scmp.eq.s32.totalorder %s78, 0
  %p80 = pneg %p79
  %82 = shalt.err (%p80)

</llo_original>
